<compile_context>
chip_gen: v7x
topology: tpu7x:2x2x1
jax: 0.10.0
libtpu: 0.0.40
codegen_flags: <defaults>
</compile_context>

<pallas_src>
from functools import partial

import jax
import jax.numpy as jnp
from jax import lax
from jax.experimental import pallas as pl
from jax.experimental.pallas import tpu as pltpu


def _round_up(v, m):
    return -(-v // m) * m


def _vmem_budget_bytes():
    """Per-call VMEM budget, derived from the chip generation when queryable."""
    cap = 64 * 1024 * 1024                       # conservative: v7x per-core VMEM
    try:
        cap = int(pltpu.get_tpu_info().vmem_capacity_bytes)
    except Exception:                            # best-effort hardware query
        pass
    # Leave compiler-scratch headroom; cap at ~100 MiB even on 128 MiB parts.
    return min((cap * 3) // 4, 100 * 1024 * 1024)


def _mxu_kernel(x_ref, w_ref, o_ref, carry_ref, cols_ref, *,
                kernel_size, dilation, c_in, c_in_p, tile_l, pad,
                multi_tile, compute_dtype):
    """im2col + one fused MXU matmul per time tile.

    x_ref:     (1, C_in, TL)       input tile, original HBM dtype
    w_ref:     (C_out, K*C_in_p)   tap-major weight slab (compute dtype)
    o_ref:     (1, C_out, TL)
    carry_ref: (C_in, pad)         causal left context carried across t
    cols_ref:  (K*C_in_p, TL)      im2col buffer feeding the single matmul
    """
    t = pl.program_id(1)

    if pad > 0 or c_in_p != c_in:
        @pl.when(t == 0)
        def _init():
            if pad > 0:
                # Zero left-pad of the causal conv (and per-batch-row reset).
                carry_ref[...] = jnp.zeros_like(carry_ref)
            if c_in_p != c_in:
                # Channel-padding rows of the im2col buffer are never written
                # again; zero them once so the (zero-padded) weight columns
                # cannot multiply uninitialized VMEM (NaN * 0 hazard).
                for k in range(kernel_size):
                    cols_ref[k * c_in_p + c_in:(k + 1) * c_in_p, :] = jnp.zeros(
                        (c_in_p - c_in, tile_l), cols_ref.dtype)

    # Build tap-k row blocks directly from [carry | current x tile]; no full
    # halo copy.  The cast to the compute dtype happens here, in-kernel.
    for k in range(kernel_size):
        s = pad - k * dilation                 # static left shift of tap k
        sc = min(s, tile_l)
        rb = k * c_in_p
        if sc > 0:
            cols_ref[rb:rb + c_in, :sc] = carry_ref[:, pad - s:pad - s + sc]
        if sc < tile_l:
            cols_ref[rb:rb + c_in, sc:] = (
                x_ref[0, :, :tile_l - sc].astype(compute_dtype))

    if pad > 0 and multi_tile:
        # Next tile's causal left context = last `pad` columns of this tile.
        carry_ref[...] = x_ref[0, :, tile_l - pad:].astype(compute_dtype)

    # Single fused MXU matmul over the K*C_in contraction, f32 accumulation.
    o_ref[0] = jnp.dot(w_ref[...], cols_ref[...],
                       preferred_element_type=jnp.float32).astype(o_ref.dtype)


def _vpu_kernel(x_ref, w_ref, o_ref, carry_ref, *,
                kernel_size, dilation, c_in, c_out, tile_l, pad,
                multi_tile, compute_dtype):
    """Broadcast-FMA path for tiny channel counts: no im2col scratch, no MXU."""
    t = pl.program_id(1)

    if pad > 0:
        @pl.when(t == 0)
        def _init():
            carry_ref[...] = jnp.zeros_like(carry_ref)

    x = x_ref[0].astype(compute_dtype)             # (C_in, TL), small
    w = w_ref[...].astype(jnp.float32)             # (C_out, K*C_in)

    acc = jnp.zeros((c_out, tile_l), jnp.float32)
    for k in range(kernel_size):
        s = pad - k * dilation
        sc = min(s, tile_l)
        if sc > 0:
            left = carry_ref[:, pad - s:pad - s + sc]
            if sc < tile_l:
                xk = jnp.concatenate([left, x[:, :tile_l - sc]], axis=1)
            else:
                xk = left
        else:
            xk = x
        xk = xk.astype(jnp.float32)
        for c in range(c_in):
            col = k * c_in + c
            acc = acc + w[:, col:col + 1] * xk[c:c + 1, :]

    if pad > 0 and multi_tile:
        carry_ref[...] = x[:, tile_l - pad:]

    o_ref[0] = acc.astype(o_ref.dtype)


def causal_conv1d(x, w, dilation, *, stride=1, tile_l=2048,
                  compute_dtype=jnp.bfloat16, out_dtype=None):
    """Causal dilated conv1d.  x: (N, C_in, L), w: (C_out, C_in, K) -> (N, C_out, L)."""
    # TODO(synk): stride > 1 is not implemented (module default is stride=1).
    assert stride == 1, "only stride=1 is implemented"
    N, C_in, L = x.shape
    C_out, C_in_w, K = w.shape
    assert C_in_w == C_in
    out_dtype = x.dtype if out_dtype is None else out_dtype
    compute_dtype = jnp.dtype(compute_dtype)
    pad = (K - 1) * dilation

    # Path selection: tiny contraction -> VPU broadcast-FMA (no im2col buffer),
    # otherwise im2col + a single fused MXU matmul per tile.
    use_vpu = (C_in * K <= 32) and (C_out <= 16)
    if use_vpu:
        c_in_p = C_in
    else:
        packing = {1: 32, 2: 16, 4: 8}.get(compute_dtype.itemsize, 8)
        c_in_p = _round_up(C_in, packing)     # sublane-aligned im2col row blocks

    # ---- time tiling; x itself is never padded or copied on the host side ----
    budget = _vmem_budget_bytes()
    x_isz = jnp.dtype(x.dtype).itemsize
    o_isz = jnp.dtype(out_dtype).itemsize
    c_isz = compute_dtype.itemsize

    def est_vmem(tl_):
        b = 2 * C_in * tl_ * x_isz + 2 * C_out * tl_ * o_isz  # dbl-buffered blocks
        b += 2 * C_out * K * c_in_p * c_isz                   # weight slab
        if not use_vpu:
            b += K * c_in_p * tl_ * c_isz                     # im2col scratch
        b += (C_out + 2 * C_in) * tl_ * 4                     # value/temp headroom
        return b + (2 << 20)

    tl_cap = min(tile_l, 1024) if use_vpu else tile_l  # bound VPU register pressure
    if L <= tl_cap:
        tl, n_tiles = L, 1
    else:
        tl = _round_up(max(tl_cap, pad, 128), 128)
        while tl > 256 and est_vmem(tl) > budget:
            tl = _round_up(tl // 2, 128)
        tl = max(tl, _round_up(max(pad, 1), 128))      # carry invariant: pad <= TL
        if tl >= L:
            tl, n_tiles = L, 1
        else:
            n_tiles = int(pl.cdiv(L, tl))              # ragged tail handled by grid
    multi_tile = n_tiles > 1

    # Weight relayout (tiny, host side): (C_out, C_in, K) -> tap-major
    # (C_out, K*C_in_p) so a single matmul covers the whole contraction.
    w_t = jnp.transpose(w, (0, 2, 1))                  # (C_out, K, C_in)
    if c_in_p != C_in:
        w_t = jnp.pad(w_t, ((0, 0), (0, 0), (0, c_in_p - C_in)))
    w_flat = w_t.reshape(C_out, K * c_in_p).astype(compute_dtype)

    common = dict(kernel_size=K, dilation=dilation, c_in=C_in, tile_l=tl,
                  pad=pad, multi_tile=multi_tile, compute_dtype=compute_dtype)
    if use_vpu:
        kernel = partial(_vpu_kernel, c_out=C_out, **common)
        scratch = [pltpu.VMEM((C_in, max(pad, 1)), compute_dtype)]
    else:
        kernel = partial(_mxu_kernel, c_in_p=c_in_p, **common)
        scratch = [pltpu.VMEM((C_in, max(pad, 1)), compute_dtype),
                   pltpu.VMEM((K * c_in_p, tl), compute_dtype)]

    # TODO(synk): v7x N==1 megacore plan (splitting the time axis across both
    # TensorCores with per-chunk left-context reload) and short-L batch folding
    # into the lane axis are not implemented.
    return pl.pallas_call(
        kernel,
        out_shape=jax.ShapeDtypeStruct((N, C_out, L), out_dtype),
        grid=(N, n_tiles),
        in_specs=[
            pl.BlockSpec((1, C_in, tl), lambda n, t: (n, 0, t)),
            pl.BlockSpec((C_out, K * c_in_p), lambda n, t: (0, 0)),
        ],
        out_specs=pl.BlockSpec((1, C_out, tl), lambda n, t: (n, 0, t)),
        scratch_shapes=scratch,
        compiler_params=pltpu.CompilerParams(
            # The carried causal context needs the time-tile axis to execute
            # sequentially (innermost, "arbitrary"); batch rows are independent.
            dimension_semantics=("parallel", "arbitrary"),
            vmem_limit_bytes=budget,
        ),
    )(x, w_flat)


def _reference(x, w, dilation, compute_dtype=None):
    """Pure-JAX reference (f32 math, optional input quantization to compute_dtype)."""
    xr = x.astype(jnp.float32)
    wr = w.astype(jnp.float32)
    if compute_dtype is not None:
        xr = xr.astype(compute_dtype).astype(jnp.float32)
        wr = wr.astype(compute_dtype).astype(jnp.float32)
    K = w.shape[-1]
    pad = (K - 1) * dilation
    x_pad = jnp.pad(xr, ((0, 0), (0, 0), (pad, 0)))
    return lax.conv_general_dilated(
        x_pad, wr, window_strides=(1,), padding="VALID",
        rhs_dilation=(dilation,), dimension_numbers=("NCH", "OIH", "NCH"),
        precision=lax.Precision.HIGHEST)


if __name__ == "__main__":
    key = jax.random.PRNGKey(0)
    k1, k2, k3, k4 = jax.random.split(key, 4)

    # Case 1: the module's configuration (channel_in=4, channel_out=8, K=3,
    # dilation=2, stride=1) at small shapes -> VPU path, single time tile,
    # strict f32 parity with the PyTorch semantics.
    channel_in, channel_out, kernel_size, dilation, stride = 4, 8, 3, 2, 1
    N, L = 2, 16
    x1 = jax.random.normal(k1, (N, channel_in, L), dtype=jnp.float32)
    w1 = 0.1 * jax.random.normal(
        k2, (channel_out, channel_in, kernel_size), dtype=jnp.float32)
    out1 = jax.block_until_ready(
        causal_conv1d(x1, w1, dilation, stride=stride, compute_dtype=jnp.float32))
    ref1 = _reference(x1, w1, dilation)
    assert out1.shape == (N, channel_out, L), out1.shape
    assert jnp.allclose(out1.astype(jnp.float32), ref1, rtol=1e-4, atol=1e-4), \
        "case 1 mismatch vs reference"

    # Case 2: larger channels, long non-multiple-of-tile sequence -> MXU im2col
    # path, multi-tile carried context, channel padding, bf16 compute, ragged
    # tail handled by the cdiv grid.
    ci, co, ks, dil = 24, 32, 3, 3
    N2, L2 = 1, 1000
    x2 = jax.random.normal(k3, (N2, ci, L2), dtype=jnp.float32)
    w2 = 0.1 * jax.random.normal(k4, (co, ci, ks), dtype=jnp.float32)
    out2 = jax.block_until_ready(
        causal_conv1d(x2, w2, dil, tile_l=256, compute_dtype=jnp.bfloat16))
    ref2 = _reference(x2, w2, dil, compute_dtype=jnp.bfloat16)
    assert out2.shape == (N2, co, L2), out2.shape
    assert jnp.allclose(out2.astype(jnp.float32), ref2, rtol=5e-3, atol=5e-3), \
        "case 2 mismatch vs reference"

    print("KERNEL_OK")
</pallas_src>

<mosaic_0001>
module attributes {stable_mosaic.version = 11 : i64} {
  func.func @_vpu_kernel(%arg0: i32, %arg1: i32, %arg2: memref<1x4x16xf32, #tpu.memory_space<vmem>>, %arg3: memref<8x12xf32, #tpu.memory_space<vmem>>, %arg4: memref<1x8x16xf32, #tpu.memory_space<vmem>>, %arg5: memref<4x4xf32, #tpu.memory_space<vmem>>) attributes {dimension_semantics = [#tpu.dimension_semantics<parallel>, #tpu.dimension_semantics<arbitrary>], iteration_bounds = array<i64: 2, 1>, scalar_prefetch = 0 : i64, scratch_operands = 1 : i64, tpu.core_type = #tpu.core_type<tc>, window_params = [{transform_indices = @transform_0, window_bounds = array<i64: 1, 4, 16>}, {pipeline_mode = #tpu.pipeline_mode<synchronous>, transform_indices = @transform_1, window_bounds = array<i64: 8, 12>}, {transform_indices = @transform_2, window_bounds = array<i64: 1, 8, 16>}]} {
    %c0_i32 = arith.constant 0 : i32
    %0 = arith.cmpi eq, %arg1, %c0_i32 : i32
    %1 = arith.extui %0 : i1 to i32
    %c0_i32_0 = arith.constant 0 : i32
    %2 = arith.cmpi ne, %1, %c0_i32_0 : i32
    scf.if %2 {
      %cst_11 = arith.constant 0.000000e+00 : f32
      %88 = vector.broadcast %cst_11 : f32 to vector<4x4xf32>
      %c0_12 = arith.constant 0 : index
      %c0_13 = arith.constant 0 : index
      %89 = vector.load %arg5[%c0_12, %c0_13] : memref<4x4xf32, #tpu.memory_space<vmem>>, vector<4x4xf32>
      tpu.vector_store %arg5[%c0_12, %c0_13], %88 {strides = array<i32>} : memref<4x4xf32, #tpu.memory_space<vmem>>, vector<4x4xf32>,
    } else {
    }
    %c0 = arith.constant 0 : index
    %c0_1 = arith.constant 0 : index
    %c0_2 = arith.constant 0 : index
    %3 = vector.load %arg2[%c0, %c0_1, %c0_2] : memref<1x4x16xf32, #tpu.memory_space<vmem>>, vector<1x4x16xf32>
    %4 = vector.shape_cast %3 : vector<1x4x16xf32> to vector<4x16xf32>
    %c0_3 = arith.constant 0 : index
    %c0_4 = arith.constant 0 : index
    %5 = vector.load %arg3[%c0_3, %c0_4] : memref<8x12xf32, #tpu.memory_space<vmem>>, vector<8x12xf32>
    %cst = arith.constant 0.000000e+00 : f32
    %6 = vector.broadcast %cst : f32 to vector<8x16xf32>
    %c0_5 = arith.constant 0 : index
    %c0_6 = arith.constant 0 : index
    %7 = vector.load %arg5[%c0_5, %c0_6] : memref<4x4xf32, #tpu.memory_space<vmem>>, vector<4x4xf32>
    %8 = vector.extract_strided_slice %4 {offsets = [0, 0], sizes = [4, 12], strides = [1, 1]} : vector<4x16xf32> to vector<4x12xf32>
    %9 = tpu.concatenate %7, %8 in 1 : vector<4x4xf32>, vector<4x12xf32> -> vector<4x16xf32>
    %10 = vector.extract_strided_slice %5 {offsets = [0, 0], sizes = [8, 1], strides = [1, 1]} : vector<8x12xf32> to vector<8x1xf32>
    %11 = vector.extract_strided_slice %9 {offsets = [0, 0], sizes = [1, 16], strides = [1, 1]} : vector<4x16xf32> to vector<1x16xf32>
    %12 = vector.broadcast %10 : vector<8x1xf32> to vector<8x16xf32>
    %13 = vector.broadcast %11 : vector<1x16xf32> to vector<8x16xf32>
    %14 = arith.mulf %12, %13 : vector<8x16xf32>
    %15 = arith.addf %6, %14 : vector<8x16xf32>
    %16 = vector.extract_strided_slice %5 {offsets = [0, 1], sizes = [8, 1], strides = [1, 1]} : vector<8x12xf32> to vector<8x1xf32>
    %17 = vector.extract_strided_slice %9 {offsets = [1, 0], sizes = [1, 16], strides = [1, 1]} : vector<4x16xf32> to vector<1x16xf32>
    %18 = vector.broadcast %16 : vector<8x1xf32> to vector<8x16xf32>
    %19 = vector.broadcast %17 : vector<1x16xf32> to vector<8x16xf32>
    %20 = arith.mulf %18, %19 : vector<8x16xf32>
    %21 = arith.addf %15, %20 : vector<8x16xf32>
    %22 = vector.extract_strided_slice %5 {offsets = [0, 2], sizes = [8, 1], strides = [1, 1]} : vector<8x12xf32> to vector<8x1xf32>
    %23 = vector.extract_strided_slice %9 {offsets = [2, 0], sizes = [1, 16], strides = [1, 1]} : vector<4x16xf32> to vector<1x16xf32>
    %24 = vector.broadcast %22 : vector<8x1xf32> to vector<8x16xf32>
    %25 = vector.broadcast %23 : vector<1x16xf32> to vector<8x16xf32>
    %26 = arith.mulf %24, %25 : vector<8x16xf32>
    %27 = arith.addf %21, %26 : vector<8x16xf32>
    %28 = vector.extract_strided_slice %5 {offsets = [0, 3], sizes = [8, 1], strides = [1, 1]} : vector<8x12xf32> to vector<8x1xf32>
    %29 = vector.extract_strided_slice %9 {offsets = [3, 0], sizes = [1, 16], strides = [1, 1]} : vector<4x16xf32> to vector<1x16xf32>
    %30 = vector.broadcast %28 : vector<8x1xf32> to vector<8x16xf32>
    %31 = vector.broadcast %29 : vector<1x16xf32> to vector<8x16xf32>
    %32 = arith.mulf %30, %31 : vector<8x16xf32>
    %33 = arith.addf %27, %32 : vector<8x16xf32>
    %c0_7 = arith.constant 0 : index
    %c2 = arith.constant 2 : index
    %34 = vector.load %arg5[%c0_7, %c2] : memref<4x4xf32, #tpu.memory_space<vmem>>, vector<4x2xf32>
    %35 = vector.extract_strided_slice %4 {offsets = [0, 0], sizes = [4, 14], strides = [1, 1]} : vector<4x16xf32> to vector<4x14xf32>
    %36 = tpu.concatenate %34, %35 in 1 : vector<4x2xf32>, vector<4x14xf32> -> vector<4x16xf32>
    %37 = vector.extract_strided_slice %5 {offsets = [0, 4], sizes = [8, 1], strides = [1, 1]} : vector<8x12xf32> to vector<8x1xf32>
    %38 = vector.extract_strided_slice %36 {offsets = [0, 0], sizes = [1, 16], strides = [1, 1]} : vector<4x16xf32> to vector<1x16xf32>
    %39 = vector.broadcast %37 : vector<8x1xf32> to vector<8x16xf32>
    %40 = vector.broadcast %38 : vector<1x16xf32> to vector<8x16xf32>
    %41 = arith.mulf %39, %40 : vector<8x16xf32>
    %42 = arith.addf %33, %41 : vector<8x16xf32>
    %43 = vector.extract_strided_slice %5 {offsets = [0, 5], sizes = [8, 1], strides = [1, 1]} : vector<8x12xf32> to vector<8x1xf32>
    %44 = vector.extract_strided_slice %36 {offsets = [1, 0], sizes = [1, 16], strides = [1, 1]} : vector<4x16xf32> to vector<1x16xf32>
    %45 = vector.broadcast %43 : vector<8x1xf32> to vector<8x16xf32>
    %46 = vector.broadcast %44 : vector<1x16xf32> to vector<8x16xf32>
    %47 = arith.mulf %45, %46 : vector<8x16xf32>
    %48 = arith.addf %42, %47 : vector<8x16xf32>
    %49 = vector.extract_strided_slice %5 {offsets = [0, 6], sizes = [8, 1], strides = [1, 1]} : vector<8x12xf32> to vector<8x1xf32>
    %50 = vector.extract_strided_slice %36 {offsets = [2, 0], sizes = [1, 16], strides = [1, 1]} : vector<4x16xf32> to vector<1x16xf32>
    %51 = vector.broadcast %49 : vector<8x1xf32> to vector<8x16xf32>
    %52 = vector.broadcast %50 : vector<1x16xf32> to vector<8x16xf32>
    %53 = arith.mulf %51, %52 : vector<8x16xf32>
    %54 = arith.addf %48, %53 : vector<8x16xf32>
    %55 = vector.extract_strided_slice %5 {offsets = [0, 7], sizes = [8, 1], strides = [1, 1]} : vector<8x12xf32> to vector<8x1xf32>
    %56 = vector.extract_strided_slice %36 {offsets = [3, 0], sizes = [1, 16], strides = [1, 1]} : vector<4x16xf32> to vector<1x16xf32>
    %57 = vector.broadcast %55 : vector<8x1xf32> to vector<8x16xf32>
    %58 = vector.broadcast %56 : vector<1x16xf32> to vector<8x16xf32>
    %59 = arith.mulf %57, %58 : vector<8x16xf32>
    %60 = arith.addf %54, %59 : vector<8x16xf32>
    %61 = vector.extract_strided_slice %5 {offsets = [0, 8], sizes = [8, 1], strides = [1, 1]} : vector<8x12xf32> to vector<8x1xf32>
    %62 = vector.extract_strided_slice %4 {offsets = [0, 0], sizes = [1, 16], strides = [1, 1]} : vector<4x16xf32> to vector<1x16xf32>
    %63 = vector.broadcast %61 : vector<8x1xf32> to vector<8x16xf32>
    %64 = vector.broadcast %62 : vector<1x16xf32> to vector<8x16xf32>
    %65 = arith.mulf %63, %64 : vector<8x16xf32>
    %66 = arith.addf %60, %65 : vector<8x16xf32>
    %67 = vector.extract_strided_slice %5 {offsets = [0, 9], sizes = [8, 1], strides = [1, 1]} : vector<8x12xf32> to vector<8x1xf32>
    %68 = vector.extract_strided_slice %4 {offsets = [1, 0], sizes = [1, 16], strides = [1, 1]} : vector<4x16xf32> to vector<1x16xf32>
    %69 = vector.broadcast %67 : vector<8x1xf32> to vector<8x16xf32>
    %70 = vector.broadcast %68 : vector<1x16xf32> to vector<8x16xf32>
    %71 = arith.mulf %69, %70 : vector<8x16xf32>
    %72 = arith.addf %66, %71 : vector<8x16xf32>
    %73 = vector.extract_strided_slice %5 {offsets = [0, 10], sizes = [8, 1], strides = [1, 1]} : vector<8x12xf32> to vector<8x1xf32>
    %74 = vector.extract_strided_slice %4 {offsets = [2, 0], sizes = [1, 16], strides = [1, 1]} : vector<4x16xf32> to vector<1x16xf32>
    %75 = vector.broadcast %73 : vector<8x1xf32> to vector<8x16xf32>
    %76 = vector.broadcast %74 : vector<1x16xf32> to vector<8x16xf32>
    %77 = arith.mulf %75, %76 : vector<8x16xf32>
    %78 = arith.addf %72, %77 : vector<8x16xf32>
    %79 = vector.extract_strided_slice %5 {offsets = [0, 11], sizes = [8, 1], strides = [1, 1]} : vector<8x12xf32> to vector<8x1xf32>
    %80 = vector.extract_strided_slice %4 {offsets = [3, 0], sizes = [1, 16], strides = [1, 1]} : vector<4x16xf32> to vector<1x16xf32>
    %81 = vector.broadcast %79 : vector<8x1xf32> to vector<8x16xf32>
    %82 = vector.broadcast %80 : vector<1x16xf32> to vector<8x16xf32>
    %83 = arith.mulf %81, %82 : vector<8x16xf32>
    %84 = arith.addf %78, %83 : vector<8x16xf32>
    %c0_8 = arith.constant 0 : index
    %c0_9 = arith.constant 0 : index
    %c0_10 = arith.constant 0 : index
    %85 = vector.load %arg4[%c0_8, %c0_9, %c0_10] : memref<1x8x16xf32, #tpu.memory_space<vmem>>, vector<1x8x16xf32>
    %86 = vector.shape_cast %85 : vector<1x8x16xf32> to vector<8x16xf32>
    %87 = vector.shape_cast %84 : vector<8x16xf32> to vector<1x8x16xf32>
    tpu.vector_store %arg4[%c0_8, %c0_9, %c0_10], %87 {strides = array<i32>} : memref<1x8x16xf32, #tpu.memory_space<vmem>>, vector<1x8x16xf32>,
    return
  }
  func.func @transform_0(%arg0: i32, %arg1: i32) -> (i32, i32, i32) {
    %c0_i32 = arith.constant 0 : i32
    %c0_i32_0 = arith.constant 0 : i32
    return %arg0, %c0_i32, %arg1 : i32, i32, i32
  }
  func.func @transform_1(%arg0: i32, %arg1: i32) -> (i32, i32) {
    %c0_i32 = arith.constant 0 : i32
    %c0_i32_0 = arith.constant 0 : i32
    %c0_i32_1 = arith.constant 0 : i32
    return %c0_i32, %c0_i32_0 : i32, i32
  }
  func.func @transform_2(%arg0: i32, %arg1: i32) -> (i32, i32, i32) {
    %c0_i32 = arith.constant 0 : i32
    %c0_i32_0 = arith.constant 0 : i32
    return %arg0, %c0_i32, %arg1 : i32, i32, i32
  }
}

</mosaic_0001>

<llo_original>
// kernel: tpu_custom_call.1
$region0: #{tpu_custom_call.1}
  #allocation0 [shape = 'u32[]', space=smem, size = 0x4, offset = 0x4, fixed_abs, tag = 'smem constant byte address 0x4 - core index']
  #allocation1 [shape = 'u32[144,128]{1,0:T(1,128)}', space=vmem, size = 0x12000, scoped, tag = 'internal scratch']
  #allocation2 [shape = 'f32[4,4]{1,0:T(4,128)}', space=vmem, size = 0x800, scoped, tag = 'scratch operand']
  %s0 = inlined_call_operand.hbm [shape: f32[2,4,16], index: 0, kind: input, shape index: {}]
  %s1 = inlined_call_operand.hbm [shape: f32[8,12], index: 1, kind: input, shape index: {}]
  %s2 = inlined_call_operand.hbm [shape: f32[2,8,16], index: 2, kind: output, shape index: {}]
  %s3 = sld [smem:[#allocation0]]
  $region53: #{tpu_custom_call.1} parent=0
    _
  %s5 = ssub.s32 1, %s3
  %s6 = scalar_select 0, %s5, %s3
  $region1: #{tpu_custom_call.1} parent=0
    #allocation3 [shape = 'u8[4096]{0}', space=vmem, size = 0x1000, scoped, tag = 'input window, operand 0']
    #allocation4 [shape = 's32[2]{0}', space=sflag, size = 0x8, scoped, tag = 'scoped memory for tpu_custom_call.1']
    #allocation5 [shape = 's32[2]{0}', space=sflag, size = 0x8, scoped, tag = 'scoped memory for tpu_custom_call.1']
    #allocation6 [shape = 'u8[4096]{0}', space=vmem, size = 0x1000, scoped, tag = 'input window, operand 1, single buffered']
    #allocation7 [shape = 's32[1]{0}', space=sflag, size = 0x4, scoped, tag = 'scoped memory for tpu_custom_call.1']
    #allocation8 [shape = 'u8[8192]{0}', space=vmem, size = 0x2000, scoped, tag = 'output window, operand 0']
    %7 = vsyncpa [#allocation4], 0
    %s8 = scalar_lea.sflag [#allocation4], 1
    %9 = vsyncpa %s8, 0
    %10 = vsyncpa [#allocation7], 0
    %11 = vsyncpa [#allocation5], 0
    %s12 = scalar_lea.sflag [#allocation5], 1
    %13 = vsyncpa %s12, 0
    loop: start=0, step=1, limit=4
    $region2: #{tpu_custom_call.1} parent=1 // loop_pre_header
      _
    $region3: #{tpu_custom_call.1} parent=1 // loop_header
      %s15 = sphi 0, %s19
      %p16 = scmp.ge.s32.totalorder %s15, 4
      %s22 = sphi 0, %s34
      %s23 = sphi 0, %s30
      %s24 = sphi 0, %s22
      %s25 = sphi 0, %s23
      %s26 = sphi 0, %s24
      %s27 = sphi 0, %s25
      %s39 = sphi 0, %s41
      %s42 = sphi 0, %s39
      %s43 = sphi 0, %s42
      %s59 = sphi 0, %s43
      %s63 = sphi 0, %s63
      %s65 = sphi 0, %s63
      %s66 = sphi 0, %s65
      %s80 = sphi 0, %s66
      %s88 = sphi 0, %s90
      %s91 = sphi 0, %s88
      %s92 = sphi 0, %s91
      %s108 = sphi 0, %s92
    $region4: #{tpu_custom_call.1} parent=1 // loop_header_branch
      %18 = sbr.rel (%p16) target = $region8
    $region5: #{tpu_custom_call.1} parent=1 // loop_body
      %s20 = ssub.s32 %s15, 1
      %s21 = ssub.s32 %s15, 2
      %s28 = sadd.s32 1, %s23
      %p29 = scmp.ge.s32.totalorder %s28, 1
      %s30 = scalar_select %p29, 0, %s28
      %s31 = sadd.s32 1, %s22
      %s32 = scalar_select %p29, %s31, %s22
      %p33 = scmp.ge.s32.totalorder %s32, 2
      %s34 = scalar_select %p33, 0, %s32
      %s35 = ssub.s32 %s22, %s34
      %s36 = ssub.s32 %s23, %s30
      %s37 = sor.u32 %s35, %s36
      %p38 = scmp.eq.s32.totalorder %s37, 0
      %s40 = sadd.s32 %s39, 1
      %s41 = scalar_select %p38, %s39, %s40
      %p44 = pneg %p38
      %p45 = scmp.eq.s32.totalorder %s15, 1
      %p46 = por %p44, %p45
      %p47 = scmp.ne.s32.totalorder %s39, %s42
      %p48 = scmp.eq.s32.totalorder %s15, 0
      %p49 = por %p47, %p48
      %p50 = scmp.ne.s32.totalorder %s39, %s42
      %p51 = scmp.eq.s32.totalorder %s20, 1
      %p52 = por %p50, %p51
      %p53 = scmp.ne.s32.totalorder %s42, %s43
      %p54 = scmp.eq.s32.totalorder %s20, 0
      %p55 = por %p53, %p54
      %p56 = scmp.ne.s32.totalorder %s42, %s43
      %p57 = scmp.eq.s32.totalorder %s21, 1
      %p58 = por %p56, %p57
      %p60 = scmp.ne.s32.totalorder %s43, %s59
      %p61 = scmp.eq.s32.totalorder %s21, 0
      %p62 = por %p60, %p61
      %s64 = sadd.s32 %s63, 1
      %p67 = scmp.eq.s32.totalorder %s15, 1
      %p68 = scmp.ne.s32.totalorder %s63, %s65
      %p69 = scmp.eq.s32.totalorder %s15, 0
      %p70 = por %p68, %p69
      %p71 = scmp.ne.s32.totalorder %s63, %s65
      %p72 = scmp.eq.s32.totalorder %s20, 1
      %p73 = por %p71, %p72
      %p74 = scmp.ne.s32.totalorder %s65, %s66
      %p75 = scmp.eq.s32.totalorder %s20, 0
      %p76 = por %p74, %p75
      %p77 = scmp.ne.s32.totalorder %s65, %s66
      %p78 = scmp.eq.s32.totalorder %s21, 1
      %p79 = por %p77, %p78
      %p81 = scmp.ne.s32.totalorder %s66, %s80
      %p82 = scmp.eq.s32.totalorder %s21, 0
      %p83 = por %p81, %p82
      %s84 = ssub.s32 %s22, %s34
      %s85 = ssub.s32 %s23, %s30
      %s86 = sor.u32 %s84, %s85
      %p87 = scmp.eq.s32.totalorder %s86, 0
      %s89 = sadd.s32 %s88, 1
      %s90 = scalar_select %p87, %s88, %s89
      %p93 = pneg %p87
      %p94 = scmp.eq.s32.totalorder %s15, 1
      %p95 = por %p93, %p94
      %p96 = scmp.ne.s32.totalorder %s88, %s91
      %p97 = scmp.eq.s32.totalorder %s15, 0
      %p98 = por %p96, %p97
      %p99 = scmp.ne.s32.totalorder %s88, %s91
      %p100 = scmp.eq.s32.totalorder %s20, 1
      %p101 = por %p99, %p100
      %p102 = scmp.ne.s32.totalorder %s91, %s92
      %p103 = scmp.eq.s32.totalorder %s20, 0
      %p104 = por %p102, %p103
      %p105 = scmp.ne.s32.totalorder %s91, %s92
      %p106 = scmp.eq.s32.totalorder %s21, 1
      %p107 = por %p105, %p106
      %p109 = scmp.ne.s32.totalorder %s92, %s108
      %p110 = scmp.eq.s32.totalorder %s21, 0
      %p111 = por %p109, %p110
      %p112 = scmp.le.s32.totalorder 1, %s15
      %p113 = scmp.lt.s32.totalorder %s15, 3
      %p114 = pnand %p112, %p113
      %p115 = pneg %p114
      // Predicated region
      $region9: #{tpu_custom_call.1} parent=5 // pred_check
        _
      $region10: #{tpu_custom_call.1} parent=5 // pred_check_branch
        %117 = sbr.rel (%p114) target = $region12
      $region11: #{tpu_custom_call.1} parent=5 // pred_region
        %s118 = ssub.s32 %s15, 1
        // Predicated region
        $region13: #{tpu_custom_call.1} parent=11 // pred_check
          %p119 = pneg %p76
        $region14: #{tpu_custom_call.1} parent=11 // pred_check_branch
          %121 = sbr.rel (%p119) target = $region16
        $region15: #{tpu_custom_call.1} parent=11 // pred_region
          %s123 = ssub.s32 128, 128
          %124 = vsyncadd [#allocation7], %s123
          %s126 = sshll.u32 [#allocation6], 4
          %s127 = int_to_ptr.vmem [resolvable:$true] %s126
          %129 = dma.hbm_to_vmem [thread:$0]  %s1, 128, %s127, [#allocation7]
        $region16: #{tpu_custom_call.1} parent=11 // pred_fallthru
          _
      $region12: #{tpu_custom_call.1} parent=5 // pred_fallthru
        _
      %p130 = scmp.lt.s32.totalorder %s15, 2
      // Predicated region
      $region17: #{tpu_custom_call.1} parent=5 // pred_check
        %p131 = pneg %p130
      $region18: #{tpu_custom_call.1} parent=5 // pred_check_branch
        %133 = sbr.rel (%p131) target = $region20
      $region19: #{tpu_custom_call.1} parent=5 // pred_region
        // Predicated region
        $region21: #{tpu_custom_call.1} parent=19 // pred_check
          %p134 = pneg %p49
        $region22: #{tpu_custom_call.1} parent=19 // pred_check_branch
          %136 = sbr.rel (%p134) target = $region24
        $region23: #{tpu_custom_call.1} parent=19 // pred_region
          %s137 = sand.u32 %s39, 1
          %s138 = scalar_lea.sflag [#allocation4], %s137
          %s139 = sand.u32 %s39, 1
          %s140 = smul.addr %s139, 4
          %s141 = scalar_lea.vmem [#allocation3], %s140
          %s143 = ssub.s32 64, 64
          %144 = vsyncadd %s138, %s143
          %s145 = sadd.s32 %s23, %s22
          %s146 = smul.addr %s145, 64
          %s147 = scalar_lea.hbm %s0, %s146
          %s149 = sshll.u32 %s141, 4
          %s150 = int_to_ptr.vmem [resolvable:$true] %s149
          %152 = dma.hbm_to_vmem [thread:$0]  %s147, 64, %s150, %s138
        $region24: #{tpu_custom_call.1} parent=19 // pred_fallthru
          _
      $region20: #{tpu_custom_call.1} parent=5 // pred_fallthru
        _
      %p153 = scmp.le.s32.totalorder 1, %s15
      %p154 = scmp.lt.s32.totalorder %s15, 3
      %p155 = pnand %p153, %p154
      %p156 = pneg %p155
      // Predicated region
      $region25: #{tpu_custom_call.1} parent=5 // pred_check
        _
      $region26: #{tpu_custom_call.1} parent=5 // pred_check_branch
        %158 = sbr.rel (%p155) target = $region28
      $region27: #{tpu_custom_call.1} parent=5 // pred_region
        %s159 = ssub.s32 %s15, 1
        %s160 = sand.u32 %s42, 1
        %s161 = scalar_lea.sflag [#allocation4], %s160
        %s162 = sand.u32 %s42, 1
        %s163 = smul.addr %s162, 4
        %s164 = scalar_lea.vmem [#allocation3], %s163
        // Predicated region
        $region29: #{tpu_custom_call.1} parent=27 // pred_check
          %p165 = pneg %p55
        $region30: #{tpu_custom_call.1} parent=27 // pred_check_branch
          %167 = sbr.rel (%p165) target = $region32
        $region31: #{tpu_custom_call.1} parent=27 // pred_region
          %168 = dma.done %s161, 64
        $region32: #{tpu_custom_call.1} parent=27 // pred_fallthru
          _
        // Predicated region
        $region33: #{tpu_custom_call.1} parent=27 // pred_check
          %p169 = pneg %p76
        $region34: #{tpu_custom_call.1} parent=27 // pred_check_branch
          %171 = sbr.rel (%p169) target = $region36
        $region35: #{tpu_custom_call.1} parent=27 // pred_region
          %172 = dma.done [#allocation7], 128
        $region36: #{tpu_custom_call.1} parent=27 // pred_fallthru
          _
        %s173 = sand.u32 %s42, 1
        %s174 = scalar_lea.sflag [#allocation4], %s173
        %s175 = sand.u32 %s42, 1
        %s176 = smul.addr %s175, 4
        %s177 = scalar_lea.vmem [#allocation3], %s176
        %p178 = pneg %p55
        %p179 = pneg %p52
        %p180 = pneg %p76
        %p181 = pneg %p73
        %p182 = pneg %p104
        %p183 = pneg %p101
        %s184 = sand.u32 %s91, 1
        %s185 = scalar_lea.sflag [#allocation5], %s184
        %s186 = sand.u32 %s91, 1
        %s187 = smul.addr %s186, 8
        %s188 = scalar_lea.vmem [#allocation8], %s187
        %p189 = scmp.eq.s32.totalorder %s25, 0
        // Predicated region
        $region37: #{tpu_custom_call.1} parent=27 // pred_check
          %p190 = pneg %p189
        $region38: #{tpu_custom_call.1} parent=27 // pred_check_branch
          %192 = sbr.rel (%p190) target = $region40
        $region39: #{tpu_custom_call.1} parent=27 // pred_region
          %vm193 = vcmask 27648
          %194 = vst.msk [vmem:[#allocation2] sm:$0xf] %vm193, 0.0
        $region40: #{tpu_custom_call.1} parent=27 // pred_fallthru
          _
        %v195 = vld [vmem:[%s164] sm:$0xf]
        %v196 = vld [vmem:[#allocation6] sm:$0xff]
        %v197 = vld [vmem:[#allocation2] sm:$0xf]
        %199 = vrot.lane.b32.xlu0 %v195, 4
        %v200 = vpop.permute.xlu0 %199
        %vm202 = vcmask 31744
        %v203 = vsel %vm202, %v197, %v200
        %205 = vset.pattern.permute.xlu0 0
        %206 = vperm.xlu0 %205, %v196
        %v207 = vpop.permute.xlu0 %206
        %v209 = vlaneseq
        %v210 = vshrl.u32 %v209, 7
        %v211 = vsub.s32 0, %v210
        %v212 = vrot.slane %v203, %v211
        %v213 = vmul.f32 %v207, %v212
        %v214 = vadd.f32 %v213, 0.0
        %215 = vset.pattern.permute.xlu0 1
        %216 = vperm.xlu0 %215, %v196
        %v217 = vpop.permute.xlu0 %216
        %v219 = vlaneseq
        %v220 = vshrl.u32 %v219, 7
        %v221 = vsub.s32 1, %v220
        %v222 = vrot.slane %v203, %v221
        %v223 = vmul.f32 %v217, %v222
        %v224 = vadd.f32 %v214, %v223
        %225 = vset.pattern.permute.xlu0 2
        %226 = vperm.xlu0 %225, %v196
        %v227 = vpop.permute.xlu0 %226
        %v229 = vlaneseq
        %v230 = vshrl.u32 %v229, 7
        %v231 = vsub.s32 2, %v230
        %v232 = vrot.slane %v203, %v231
        %v233 = vmul.f32 %v227, %v232
        %v234 = vadd.f32 %v224, %v233
        %235 = vset.pattern.permute.xlu0 3
        %236 = vperm.xlu0 %235, %v196
        %v237 = vpop.permute.xlu0 %236
        %v239 = vlaneseq
        %v240 = vshrl.u32 %v239, 7
        %v241 = vsub.s32 3, %v240
        %v242 = vrot.slane %v203, %v241
        %v243 = vmul.f32 %v237, %v242
        %v244 = vadd.f32 %v234, %v243
        %246 = vrot.lane.b32.xlu0 %v197, 126
        %v247 = vpop.permute.xlu0 %246
        %249 = vrot.lane.b32.xlu0 %v195, 2
        %v250 = vpop.permute.xlu0 %249
        %vm252 = vcmask 15360
        %v253 = vsel %vm252, %v247, %v250
        %254 = vset.pattern.permute.xlu0 4
        %255 = vperm.xlu0 %254, %v196
        %v256 = vpop.permute.xlu0 %255
        %v258 = vlaneseq
        %v259 = vshrl.u32 %v258, 7
        %v260 = vsub.s32 0, %v259
        %v261 = vrot.slane %v253, %v260
        %v262 = vmul.f32 %v256, %v261
        %v263 = vadd.f32 %v244, %v262
        %264 = vset.pattern.permute.xlu0 5
        %265 = vperm.xlu0 %264, %v196
        %v266 = vpop.permute.xlu0 %265
        %v268 = vlaneseq
        %v269 = vshrl.u32 %v268, 7
        %v270 = vsub.s32 1, %v269
        %v271 = vrot.slane %v253, %v270
        %v272 = vmul.f32 %v266, %v271
        %v273 = vadd.f32 %v263, %v272
        %274 = vset.pattern.permute.xlu0 6
        %275 = vperm.xlu0 %274, %v196
        %v276 = vpop.permute.xlu0 %275
        %v278 = vlaneseq
        %v279 = vshrl.u32 %v278, 7
        %v280 = vsub.s32 2, %v279
        %v281 = vrot.slane %v253, %v280
        %v282 = vmul.f32 %v276, %v281
        %v283 = vadd.f32 %v273, %v282
        %284 = vset.pattern.permute.xlu0 7
        %285 = vperm.xlu0 %284, %v196
        %v286 = vpop.permute.xlu0 %285
        %v288 = vlaneseq
        %v289 = vshrl.u32 %v288, 7
        %v290 = vsub.s32 3, %v289
        %v291 = vrot.slane %v253, %v290
        %v292 = vmul.f32 %v286, %v291
        %v293 = vadd.f32 %v283, %v292
        %294 = vset.pattern.permute.xlu0 8
        %295 = vperm.xlu0 %294, %v196
        %v296 = vpop.permute.xlu0 %295
        %v298 = vlaneseq
        %v299 = vshrl.u32 %v298, 7
        %v300 = vsub.s32 0, %v299
        %v301 = vrot.slane %v195, %v300
        %v302 = vmul.f32 %v296, %v301
        %v303 = vadd.f32 %v293, %v302
        %304 = vset.pattern.permute.xlu0 9
        %305 = vperm.xlu0 %304, %v196
        %v306 = vpop.permute.xlu0 %305
        %v308 = vlaneseq
        %v309 = vshrl.u32 %v308, 7
        %v310 = vsub.s32 1, %v309
        %v311 = vrot.slane %v195, %v310
        %v312 = vmul.f32 %v306, %v311
        %v313 = vadd.f32 %v303, %v312
        %314 = vset.pattern.permute.xlu0 10
        %315 = vperm.xlu0 %314, %v196
        %v316 = vpop.permute.xlu0 %315
        %v318 = vlaneseq
        %v319 = vshrl.u32 %v318, 7
        %v320 = vsub.s32 2, %v319
        %v321 = vrot.slane %v195, %v320
        %v322 = vmul.f32 %v316, %v321
        %v323 = vadd.f32 %v313, %v322
        %324 = vset.pattern.permute.xlu0 11
        %325 = vperm.xlu0 %324, %v196
        %v326 = vpop.permute.xlu0 %325
        %v328 = vlaneseq
        %v329 = vshrl.u32 %v328, 7
        %v330 = vsub.s32 3, %v329
        %v331 = vrot.slane %v195, %v330
        %v332 = vmul.f32 %v326, %v331
        %v333 = vadd.f32 %v323, %v332
        %vm334 = vcmask 130048
        %335 = vst.msk [vmem:[%s188] sm:$0xff] %vm334, %v333
        %s336 = sand.u32 %s91, 1
        %s337 = scalar_lea.sflag [#allocation5], %s336
        %s338 = sand.u32 %s91, 1
        %s339 = smul.addr %s338, 8
        %s340 = scalar_lea.vmem [#allocation8], %s339
        // Predicated region
        $region41: #{tpu_custom_call.1} parent=27 // pred_check
          %p341 = pneg %p101
        $region42: #{tpu_custom_call.1} parent=27 // pred_check_branch
          %343 = sbr.rel (%p341) target = $region44
        $region43: #{tpu_custom_call.1} parent=27 // pred_region
          %s345 = ssub.s32 128, 128
          %346 = vsyncadd %s337, %s345
          %s347 = sadd.s32 %s25, %s24
          %s348 = smul.addr %s347, 128
          %s349 = scalar_lea.hbm %s2, %s348
          %s351 = sshll.u32 %s340, 4
          %s352 = int_to_ptr.vmem [resolvable:$true] %s351
          %354 = dma.vmem_to_hbm [thread:$0]  %s352, 128, %s349, %s337
        $region44: #{tpu_custom_call.1} parent=27 // pred_fallthru
          _
      $region28: #{tpu_custom_call.1} parent=5 // pred_fallthru
        _
      %p355 = scmp.le.s32.totalorder 2, %s15
      // Predicated region
      $region45: #{tpu_custom_call.1} parent=5 // pred_check
        %p356 = pneg %p355
      $region46: #{tpu_custom_call.1} parent=5 // pred_check_branch
        %358 = sbr.rel (%p356) target = $region48
      $region47: #{tpu_custom_call.1} parent=5 // pred_region
        %s359 = ssub.s32 %s15, 2
        // Predicated region
        $region49: #{tpu_custom_call.1} parent=47 // pred_check
          %p360 = pneg %p107
        $region50: #{tpu_custom_call.1} parent=47 // pred_check_branch
          %362 = sbr.rel (%p360) target = $region52
        $region51: #{tpu_custom_call.1} parent=47 // pred_region
          %s363 = sand.u32 %s92, 1
          %s364 = scalar_lea.sflag [#allocation5], %s363
          %s365 = sand.u32 %s92, 1
          %s366 = smul.addr %s365, 8
          %s367 = scalar_lea.vmem [#allocation8], %s366
          %368 = dma.done %s364, 128
        $region52: #{tpu_custom_call.1} parent=47 // pred_fallthru
          _
      $region48: #{tpu_custom_call.1} parent=5 // pred_fallthru
        _
    $region6: #{tpu_custom_call.1} parent=1 // loop_footer
      %s19 = sadd.s32 1, %s15
    $region7: #{tpu_custom_call.1} parent=1 // loop_footer_branch
      %14 = sbr.rel target = $region3
    $region8: #{tpu_custom_call.1} parent=1 // loop_exit
      _
    %369 = vsyncpa [#allocation4], 1
    %s370 = scalar_lea.sflag [#allocation4], 1
    %371 = vsyncpa %s370, 1
    %372 = vsyncpa [#allocation7], 1
    %373 = vsyncpa [#allocation5], 1
    %s374 = scalar_lea.sflag [#allocation5], 1
    %375 = vsyncpa %s374, 1

</llo_original>
